<compile_context>
chip_gen: v5e
topology: v5e:2x2
jax: 0.10.0
libtpu: 0.0.40
codegen_flags: <defaults>
</compile_context>

<pallas_src>
import jax
import jax.numpy as jnp
from jax.experimental import pallas as pl
from jax.experimental.pallas import tpu as pltpu


def fc_kernel(x_ref, w1_ref, b1_ref, w2_ref, b2_ref, o_ref):
    # fc1 on the MXU: (TB, D) @ (D, H) -> (TB, H), f32 accumulate.
    h = jnp.dot(x_ref[...], w1_ref[...], preferred_element_type=jnp.float32)
    h = jnp.maximum(h + b1_ref[...], 0.0)                      # bias + ReLU (VPU)
    # fc2 with out_features=1: elementwise multiply (VPU) + lane reduce (XLU)
    # instead of an (TB,H)@(H,1) matmul that would waste the MXU on one column.
    y = jnp.sum(h * w2_ref[...], axis=-1, keepdims=True)       # (TB, 1)
    y = y + b2_ref[0, 0]                                       # SMEM scalar bias
    o_ref[...] = jax.nn.sigmoid(y).astype(o_ref.dtype)


def fc_forward(x, w1, b1, w2, b2, *, tb=None):
    """x: (B, D); w1: (D, H); b1: (1, H); w2: (H, 1); b2: (1, 1). Returns (B, 1)."""
    B, D = x.shape
    H = w1.shape[1]
    assert w1.shape == (D, H)
    assert b1.shape == (1, H)
    assert w2.shape == (H, 1)
    assert b2.shape == (1, 1)

    # fc2 weight presented as a (1, H) row so the kernel can broadcast-multiply.
    w2_row = w2.reshape(1, H)

    # Batch tile: large enough to amortize per-grid-step overhead, multiple of 8
    # (full sublanes). Working set per step is tiny (D=H small), so 1024 rows is
    # well inside scoped VMEM on v5e/v6e/v7x.
    if tb is None:
        tb = min(B, 1024)
    if B >= 8:
        tb = max(8, (min(tb, B) // 8) * 8)
    else:
        tb = B

    # Pad the batch so the grid tiles evenly; padded rows are sliced off below.
    n_tiles = pl.cdiv(B, tb)
    B_pad = n_tiles * tb
    x_in = jnp.pad(x, ((0, B_pad - B), (0, 0))) if B_pad != B else x

    out = pl.pallas_call(
        fc_kernel,
        out_shape=jax.ShapeDtypeStruct((B_pad, 1), x.dtype),
        grid=(n_tiles,),
        in_specs=[
            # x: tiled over the batch -> software-pipelined DMA per tile.
            pl.BlockSpec((tb, D), lambda i: (i, 0)),
            # Weights / b1: constant index map -> stay resident in VMEM.
            pl.BlockSpec((D, H), lambda i: (0, 0)),
            pl.BlockSpec((1, H), lambda i: (0, 0)),
            pl.BlockSpec((1, H), lambda i: (0, 0)),
            # b2: scalar via SMEM (avoids a padded (8,128) VMEM tile + DMA per step).
            pl.BlockSpec(memory_space=pltpu.MemorySpace.SMEM),
        ],
        out_specs=pl.BlockSpec((tb, 1), lambda i: (i, 0)),
        compiler_params=pltpu.CompilerParams(
            # Batch rows are independent: parallel axis shards across the two
            # TensorCores on v7x; neutral on v5e/v6e.
            dimension_semantics=("parallel",)
        ),
    )(x_in, w1, b1, w2_row, b2)

    return out[:B] if B_pad != B else out


def _ref(x, w1, b1, w2, b2):
    return jax.nn.sigmoid(jnp.maximum(x @ w1 + b1, 0.0) @ w2 + b2)


if __name__ == "__main__":
    # Shapes consistent with the module: FC(input_dim=32, hidden_dim=32).
    B, D, H = 8, 32, 32

    key = jax.random.PRNGKey(0)
    kx, kw1, kb1, kw2, kb2, kx2 = jax.random.split(key, 6)

    x = jax.random.normal(kx, (B, D), dtype=jnp.float32)

    # Deterministic PyTorch nn.Linear-style uniform init, stored pre-transposed (in, out).
    bound1 = 1.0 / jnp.sqrt(D)
    w1 = jax.random.uniform(kw1, (D, H), minval=-bound1, maxval=bound1, dtype=jnp.float32)
    b1 = jax.random.uniform(kb1, (1, H), minval=-bound1, maxval=bound1, dtype=jnp.float32)
    bound2 = 1.0 / jnp.sqrt(H)
    w2 = jax.random.uniform(kw2, (H, 1), minval=-bound2, maxval=bound2, dtype=jnp.float32)
    b2 = jax.random.uniform(kb2, (1, 1), minval=-bound2, maxval=bound2, dtype=jnp.float32)

    out = fc_forward(x, w1, b1, w2, b2)
    jax.block_until_ready(out)
    ref = _ref(x, w1, b1, w2, b2)
    assert out.shape == (B, 1)
    assert jnp.allclose(out, ref, atol=1e-5, rtol=1e-5)

    # Second check: larger, non-tile-multiple batch exercises the batch tiling,
    # pipelining, and padding path (TB=256, B=528 -> padded to 768).
    B2 = 528
    x2 = jax.random.normal(kx2, (B2, D), dtype=jnp.float32)
    out2 = fc_forward(x2, w1, b1, w2, b2, tb=256)
    jax.block_until_ready(out2)
    ref2 = _ref(x2, w1, b1, w2, b2)
    assert out2.shape == (B2, 1)
    assert jnp.allclose(out2, ref2, atol=1e-5, rtol=1e-5)

    print("KERNEL_OK")
</pallas_src>

<mosaic_0001>
module attributes {stable_mosaic.version = 11 : i64} {
  func.func @fc_kernel(%arg0: i32, %arg1: memref<8x32xf32, #tpu.memory_space<vmem>>, %arg2: memref<32x32xf32, #tpu.memory_space<vmem>>, %arg3: memref<1x32xf32, #tpu.memory_space<vmem>>, %arg4: memref<1x32xf32, #tpu.memory_space<vmem>>, %arg5: memref<1x1xf32, #tpu.memory_space<smem>>, %arg6: memref<8x1xf32, #tpu.memory_space<vmem>>) attributes {dimension_semantics = [#tpu.dimension_semantics<parallel>], iteration_bounds = array<i64: 1>, scalar_prefetch = 0 : i64, scratch_operands = 0 : i64, tpu.core_type = #tpu.core_type<tc>, window_params = [{transform_indices = @transform_0, window_bounds = array<i64: 8, 32>}, {pipeline_mode = #tpu.pipeline_mode<synchronous>, transform_indices = @transform_1, window_bounds = array<i64: 32, 32>}, {pipeline_mode = #tpu.pipeline_mode<synchronous>, transform_indices = @transform_2, window_bounds = array<i64: 1, 32>}, {pipeline_mode = #tpu.pipeline_mode<synchronous>, transform_indices = @transform_3, window_bounds = array<i64: 1, 32>}, {transform_indices = @transform_4, window_bounds = array<i64: 1, 1>}, {transform_indices = @transform_5, window_bounds = array<i64: 8, 1>}]} {
    %c0 = arith.constant 0 : index
    %c0_0 = arith.constant 0 : index
    %0 = vector.load %arg1[%c0, %c0_0] : memref<8x32xf32, #tpu.memory_space<vmem>>, vector<8x32xf32>
    %c0_1 = arith.constant 0 : index
    %c0_2 = arith.constant 0 : index
    %1 = vector.load %arg2[%c0_1, %c0_2] : memref<32x32xf32, #tpu.memory_space<vmem>>, vector<32x32xf32>
    %cst = arith.constant dense<0.000000e+00> : vector<8x32xf32>
    %2 = tpu.matmul %0, %1, %cst {dimension_numbers = #tpu.dot_dimension_numbers<[1], [0], [0], [1], [0, 0, 1, 1], [], []>} : vector<8x32xf32>, vector<32x32xf32>, vector<8x32xf32> -> vector<8x32xf32>
    %c0_3 = arith.constant 0 : index
    %c0_4 = arith.constant 0 : index
    %3 = vector.load %arg3[%c0_3, %c0_4] : memref<1x32xf32, #tpu.memory_space<vmem>>, vector<1x32xf32>
    %4 = vector.broadcast %3 : vector<1x32xf32> to vector<8x32xf32>
    %5 = arith.addf %2, %4 : vector<8x32xf32>
    %cst_5 = arith.constant 0.000000e+00 : f32
    %6 = vector.broadcast %cst_5 : f32 to vector<8x32xf32>
    %7 = arith.maximumf %5, %6 : vector<8x32xf32>
    %c0_6 = arith.constant 0 : index
    %c0_7 = arith.constant 0 : index
    %8 = vector.load %arg4[%c0_6, %c0_7] : memref<1x32xf32, #tpu.memory_space<vmem>>, vector<1x32xf32>
    %9 = vector.broadcast %8 : vector<1x32xf32> to vector<8x32xf32>
    %10 = arith.mulf %7, %9 : vector<8x32xf32>
    %cst_8 = arith.constant dense<0.000000e+00> : vector<8xf32>
    %11 = vector.multi_reduction <add>, %10, %cst_8 [1] : vector<8x32xf32> to vector<8xf32>
    %12 = vector.shape_cast %11 : vector<8xf32> to vector<8x1xf32>
    %c0_9 = arith.constant 0 : index
    %c0_10 = arith.constant 0 : index
    %13 = memref.load %arg5[%c0_9, %c0_10] : memref<1x1xf32, #tpu.memory_space<smem>>
    %14 = vector.broadcast %13 : f32 to vector<8x1xf32>
    %15 = arith.addf %12, %14 : vector<8x1xf32>
    %16 = arith.negf %15 : vector<8x1xf32>
    %17 = math.exp %16 : vector<8x1xf32>
    %cst_11 = arith.constant 1.000000e+00 : f32
    %18 = vector.broadcast %cst_11 : f32 to vector<8x1xf32>
    %19 = arith.addf %18, %17 : vector<8x1xf32>
    %20 = arith.divf %18, %19 : vector<8x1xf32>
    %c0_12 = arith.constant 0 : index
    %c0_13 = arith.constant 0 : index
    %21 = vector.load %arg6[%c0_12, %c0_13] : memref<8x1xf32, #tpu.memory_space<vmem>>, vector<8x1xf32>
    tpu.vector_store %arg6[%c0_12, %c0_13], %20 {strides = array<i32>} : memref<8x1xf32, #tpu.memory_space<vmem>>, vector<8x1xf32>,
    return
  }
  func.func @transform_0(%arg0: i32) -> (i32, i32) {
    %c0_i32 = arith.constant 0 : i32
    %c0_i32_0 = arith.constant 0 : i32
    return %arg0, %c0_i32 : i32, i32
  }
  func.func @transform_1(%arg0: i32) -> (i32, i32) {
    %c0_i32 = arith.constant 0 : i32
    %c0_i32_0 = arith.constant 0 : i32
    %c0_i32_1 = arith.constant 0 : i32
    return %c0_i32, %c0_i32_0 : i32, i32
  }
  func.func @transform_2(%arg0: i32) -> (i32, i32) {
    %c0_i32 = arith.constant 0 : i32
    %c0_i32_0 = arith.constant 0 : i32
    %c0_i32_1 = arith.constant 0 : i32
    return %c0_i32, %c0_i32_0 : i32, i32
  }
  func.func @transform_3(%arg0: i32) -> (i32, i32) {
    %c0_i32 = arith.constant 0 : i32
    %c0_i32_0 = arith.constant 0 : i32
    %c0_i32_1 = arith.constant 0 : i32
    return %c0_i32, %c0_i32_0 : i32, i32
  }
  func.func @transform_4(%arg0: i32) -> (i32, i32) {
    %c0_i32 = arith.constant 0 : i32
    %c0_i32_0 = arith.constant 0 : i32
    %c0_i32_1 = arith.constant 0 : i32
    return %c0_i32, %c0_i32_0 : i32, i32
  }
  func.func @transform_5(%arg0: i32) -> (i32, i32) {
    %c0_i32 = arith.constant 0 : i32
    %c0_i32_0 = arith.constant 0 : i32
    return %arg0, %c0_i32 : i32, i32
  }
}

</mosaic_0001>

<llo_original>
// kernel: tpu_custom_call.1
$region0: #{tpu_custom_call.1}
  #allocation0 [shape = 'u32[]', space=smem, size = 0x4, offset = 0x4, fixed_abs, tag = 'smem constant byte address 0x4 - core index']
  #allocation1 [shape = 'u32[72,128]{1,0:T(1,128)}', space=vmem, size = 0x9000, scoped, tag = 'internal scratch']
  #allocation2 [shape = 'f32[1,1]{1,0:T(1,128)S(6)}', space=smem, size = 0x200, scoped, tag = 'scoped memory for tpu_custom_call.1']
  %s0 = inlined_call_operand.hbm [shape: f32[8,32], index: 0, kind: input, shape index: {}]
  %s1 = inlined_call_operand.hbm [shape: f32[32,32], index: 1, kind: input, shape index: {}]
  %s2 = inlined_call_operand.vmem [shape: f32[1,32], index: 2, kind: input, shape index: {}]
  %s3 = inlined_call_operand.vmem [shape: f32[1,32], index: 3, kind: input, shape index: {}]
  %s4 = inlined_call_operand.<no memory space> [shape: f32[1,1], index: 4, kind: input, shape index: {}]
  %s5 = inlined_call_operand.vmem [shape: f32[8,1], index: 5, kind: output, shape index: {}]
  %s6 = sld [smem:[#allocation0]]
  $region38: #{tpu_custom_call.1} parent=0
    _
  %s8 = ssub.s32 1, %s6
  %s9 = scalar_select 0, %s8, %s6
  %10 = sst [smem:[#allocation2]] %s4
  $region1: #{tpu_custom_call.1} parent=0
    #allocation3 [shape = 'u8[4096]{0}', space=vmem, size = 0x1000, scoped, tag = 'input window, operand 0, single buffered']
    #allocation4 [shape = 's32[1]{0}', space=sflag, size = 0x4, scoped, tag = 'scoped memory for tpu_custom_call.1']
    #allocation5 [shape = 'u8[16384]{0}', space=vmem, size = 0x4000, scoped, tag = 'input window, operand 1, single buffered']
    #allocation6 [shape = 's32[1]{0}', space=sflag, size = 0x4, scoped, tag = 'scoped memory for tpu_custom_call.1']
    %11 = vsyncpa [#allocation4], 0
    %12 = vsyncpa [#allocation6], 0
    // Predicated region
    $region2: #{tpu_custom_call.1} parent=1 // pred_check
      _
    $region3: #{tpu_custom_call.1} parent=1 // pred_check_branch
      %14 = sbr.rel (0) target = $region5
    $region4: #{tpu_custom_call.1} parent=1 // pred_region
      %16 = vsyncadd [#allocation4], 0
      %s18 = sshll.u32 %s0, 4
      %s19 = int_to_ptr.hbm [resolvable:$true] %s18
      %s20 = sshll.u32 [#allocation3], 4
      %s21 = int_to_ptr.vmem [resolvable:$true] %s20
      %23 = dma.hbm_to_vmem [thread:$0]  %s19, 128, %s21, [#allocation4]
    $region5: #{tpu_custom_call.1} parent=1 // pred_fallthru
      _
    // Predicated region
    $region6: #{tpu_custom_call.1} parent=1 // pred_check
      _
    $region7: #{tpu_custom_call.1} parent=1 // pred_check_branch
      %25 = sbr.rel (0) target = $region9
    $region8: #{tpu_custom_call.1} parent=1 // pred_region
      %27 = vsyncadd [#allocation6], 0
      %s28 = sshll.u32 %s1, 4
      %s29 = int_to_ptr.hbm [resolvable:$true] %s28
      %s30 = sshll.u32 [#allocation5], 4
      %s31 = int_to_ptr.vmem [resolvable:$true] %s30
      %36 = dma.hbm_to_vmem [thread:$0]  %s29, 512, %s31, [#allocation6], 128, 128, 8
    $region9: #{tpu_custom_call.1} parent=1 // pred_fallthru
      _
    // Predicated region
    $region10: #{tpu_custom_call.1} parent=1 // pred_check
      _
    $region11: #{tpu_custom_call.1} parent=1 // pred_check_branch
      %38 = sbr.rel (0) target = $region13
    $region12: #{tpu_custom_call.1} parent=1 // pred_region
      _
    $region13: #{tpu_custom_call.1} parent=1 // pred_fallthru
      _
    // Predicated region
    $region14: #{tpu_custom_call.1} parent=1 // pred_check
      _
    $region15: #{tpu_custom_call.1} parent=1 // pred_check_branch
      %40 = sbr.rel (0) target = $region17
    $region16: #{tpu_custom_call.1} parent=1 // pred_region
      _
    $region17: #{tpu_custom_call.1} parent=1 // pred_fallthru
      _
    // Predicated region
    $region18: #{tpu_custom_call.1} parent=1 // pred_check
      _
    $region19: #{tpu_custom_call.1} parent=1 // pred_check_branch
      %42 = sbr.rel (0) target = $region21
    $region20: #{tpu_custom_call.1} parent=1 // pred_region
      _
    $region21: #{tpu_custom_call.1} parent=1 // pred_fallthru
      _
    // Predicated region
    $region22: #{tpu_custom_call.1} parent=1 // pred_check
      _
    $region23: #{tpu_custom_call.1} parent=1 // pred_check_branch
      %44 = sbr.rel (0) target = $region25
    $region24: #{tpu_custom_call.1} parent=1 // pred_region
      %46 = dma.done [#allocation4], 128
    $region25: #{tpu_custom_call.1} parent=1 // pred_fallthru
      _
    // Predicated region
    $region26: #{tpu_custom_call.1} parent=1 // pred_check
      _
    $region27: #{tpu_custom_call.1} parent=1 // pred_check_branch
      %48 = sbr.rel (0) target = $region29
    $region28: #{tpu_custom_call.1} parent=1 // pred_region
      %50 = dma.done [#allocation6], 512
    $region29: #{tpu_custom_call.1} parent=1 // pred_fallthru
      _
    %v51 = vld [vmem:[#allocation3] sm:$0xff]
    %v52 = vld [vmem:[#allocation5] sm:$0xff]
    %v53 = vld [vmem:[#allocation5 + $0x8] sm:$0xff]
    %v54 = vld [vmem:[#allocation5 + $0x10] sm:$0xff]
    %v55 = vld [vmem:[#allocation5 + $0x18] sm:$0xff]
    %v56 = vld [vmem:[%s2] sm:$0x1]
    %v58 = vperm.slane %v56, 0
    %vm60 = vcmask 261120
    %v62 = vsel %vm60, %v51, 0
    %64 = vmatpush.msra.mxu0 0.0
    %65 = vmatpush.msra.mxu0 0.0
    %66 = vmatpush.msra.mxu0 0.0
    %67 = vmatpush.msra.mxu0 0.0
    %68 = vmatpush.msra.mxu0 0.0
    %69 = vmatpush.msra.mxu0 0.0
    %70 = vmatpush.msra.mxu0 0.0
    %71 = vmatpush.msra.mxu0 0.0
    %72 = vmatpush.msra.mxu0 0.0
    %73 = vmatpush.msra.mxu0 0.0
    %74 = vmatpush.msra.mxu0 0.0
    %75 = vmatpush.msra.mxu0 0.0
    %76 = vmatpush.msra.mxu0 %v55
    %77 = vmatpush.msra.mxu0 %v54
    %78 = vmatpush.msra.mxu0 %v53
    %79 = vmatpush.msra.mxu0 %v52
    %80 = vmatmul.f32.gmra.mxu0 %v62
    %v81 = vpop.f32.mrf.mxu0
    %v82 = vadd.f32 %v58, %v81
    %83 = vdwg.mxu0
    %v84 = vmax.f32 %v82, 0.0
    %v85 = vld [vmem:[%s3] sm:$0x1]
    %v87 = vperm.slane %v85, 0
    %v89 = vmul.f32 %v84, %v87
    %v90 = vsel %vm60, %v89, 0.0
    %91 = vadd.xlane.f32.xlu0 %v90
    %v92 = vpop.xlane.xlu0 %91
    %s93 = sld [smem:[#allocation2]]
    %v94 = vstv %s93
    %v95 = vadd.f32 %v92, %v94
    %v96 = vxor.u32 %v95, 2147483648
    %v97 = vmul.f32 %v96, 1.442695
    %v98 = vpow.pop %v97
    %v99 = vadd.f32 %v98, 1.0
    %v100 = vrcp.pop %v99
    %v101 = vmul.f32 %v99, %v100
    %v102 = vsub.f32 1.0, %v101
    %v103 = vmul.f32 %v100, %v102
    %v104 = vadd.f32 %v100, %v103
    %vm105 = vweird.f32 %v99
    %vm106 = vweird.f32 %v100
    %vm107 = vmor %vm105, %vm106
    %v108 = vsel %vm107, %v100, %v104
    %v109 = vand.u32 2147483647, %v99
    %vm110 = vcmp.eq.f32.partialorder %v109, 8.507059e+37
    %v111 = vand.u32 %v99, 2147483648
    %v112 = vor.u32 1.1754944e-38, %v111
    %v113 = vsel %vm110, %v112, %v108
    %v114 = vmul.f32 1.0, %v113
    %vm115 = vcmask 7168
    %116 = vst.msk [vmem:[%s5] sm:$0xff] %vm115, %v114
    // Predicated region
    $region30: #{tpu_custom_call.1} parent=1 // pred_check
      _
    $region31: #{tpu_custom_call.1} parent=1 // pred_check_branch
      %118 = sbr.rel (0) target = $region33
    $region32: #{tpu_custom_call.1} parent=1 // pred_region
      _
    $region33: #{tpu_custom_call.1} parent=1 // pred_fallthru
      _
    // Predicated region
    $region34: #{tpu_custom_call.1} parent=1 // pred_check
      _
    $region35: #{tpu_custom_call.1} parent=1 // pred_check_branch
      %120 = sbr.rel (0) target = $region37
    $region36: #{tpu_custom_call.1} parent=1 // pred_region
      _
    $region37: #{tpu_custom_call.1} parent=1 // pred_fallthru
      _
    %121 = vsyncpa [#allocation4], 1
    %122 = vsyncpa [#allocation6], 1

</llo_original>
